<compile_context>
chip_gen: v5e
topology: v5e:2x2
jax: 0.10.0
libtpu: 0.0.40
codegen_flags: <defaults>
</compile_context>

<pallas_src>
import jax
import jax.numpy as jnp
from jax.experimental import pallas as pl
from jax.experimental.pallas import tpu as pltpu


def _round_up(x: int, m: int) -> int:
    return ((x + m - 1) // m) * m


def weighted_aggregate_kernel(aux_ref, w_ref, mask_ref, out_ref, faw_ref):
    tb, v, f = aux_ref.shape
    m = tb * v

    # ---- aux @ attention_weights: one row-dense (M, F) @ (F, F) matmul ------
    a = aux_ref[...].reshape(m, f)                    # native dtype (bf16-ready)
    a2 = jnp.dot(a, w_ref[...],
                 preferred_element_type=jnp.float32)  # (M, F), f32 accumulate

    # ---- per-batch gram  prod[b] = aux2[b] @ aux2[b].T ----------------------
    # One lane-dense (M, F) x (M, F)^T matmul; cross-batch terms are killed by
    # the precomputed block-diagonal mask (M = TILE_B*V is kept ~256 by the
    # wrapper so the wasted off-diagonal MXU work stays negligible).
    a2_lo = a2.astype(aux_ref.dtype)                  # MXU-native operand dtype
    g = jnp.einsum('if,jf->ij', a2_lo, a2_lo,
                   preferred_element_type=jnp.float32)            # (M, M) f32
    mask = mask_ref[...]                                          # (M, M) f32
    rg = jnp.maximum(g, 0.0) * mask                   # ReLU + same-batch mask

    # rg is symmetric, so row sums == column sums; keep both layouts so the
    # epilogue (needs (M, 1)) and the lane-dense faw store (needs (1, M)) are
    # both relayout-free.
    rs_col = jnp.sum(rg, axis=1, keepdims=True)       # (M, 1) faw numerators
    rs_row = jnp.sum(rg, axis=0, keepdims=True)       # (1, M) same values

    # per-batch totals, broadcast back to flat column / flat row index
    tot_col = jnp.sum(mask * rs_row, axis=1, keepdims=True)       # (M, 1)
    tot_row = jnp.sum(mask * rs_col, axis=0, keepdims=True)       # (1, M)

    # torch.div -> EUP reciprocal (own VLIW slot). NOTE: like the PyTorch
    # reference, an all-non-positive prod block would give inf/NaN here.
    faw_col = rs_col * pl.reciprocal(tot_col, approx=True)        # (M, 1)
    faw_row = rs_row * pl.reciprocal(tot_row, approx=True)        # (1, M)

    # ---- output[b] = sum_v faw[b, v] * aux2[b, v, :] ------------------------
    # broadcast-mul + small sublane reduce; VPU/XLU have slack here so keep it
    # off the MXU (a (1,V)@(V,F) bmm would have terrible occupancy at V=8).
    weighted = a2 * faw_col                                       # (M, F) f32
    out = jnp.sum(weighted.reshape(tb, v, f), axis=1)             # (TB, F)
    out_ref[...] = out.astype(out_ref.dtype)

    # lane-dense f32 store of this tile's attention weights
    faw_ref[...] = faw_row.reshape(1, 1, m)


def weighted_aggregate(aux, attn_w, *, block_b=None):
    """aux: (B, V, F) features after backbone + lifting. attn_w: (F, F).

    Returns (output (B, F) in aux.dtype, final_attention_weights (B, V) f32).
    """
    B, V, F = aux.shape
    if block_b is None:
        # Aim for >= 256 MXU rows per tile (fills the 256-wide v6e/v7x MXU;
        # already plenty on v5e's 128-wide MXU) while keeping block_b a
        # multiple of 8 so the (block_b, F) output block obeys (8, 128) tiling
        # and the (M, M) gram/mask stay small.
        block_b = _round_up(max(8, pl.cdiv(256, V)), 8)
    if B <= block_b:
        block_b = B                      # single tile: full-extent blocks
    b_pad = _round_up(B, block_b)
    grid_b = b_pad // block_b
    m_tile = block_b * V

    aux_in = aux if b_pad == B else jnp.pad(
        aux, ((0, b_pad - B), (0, 0), (0, 0)))

    # Block-diagonal (same-batch) mask for the flattened gram; identical for
    # every tile, so its constant index_map keeps it VMEM-resident.
    blk_id = jnp.arange(m_tile, dtype=jnp.int32) // V
    mask = (blk_id[:, None] == blk_id[None, :]).astype(jnp.float32)

    out_shape = (
        jax.ShapeDtypeStruct((b_pad, F), aux.dtype),             # aggregated output
        jax.ShapeDtypeStruct((grid_b, 1, m_tile), jnp.float32),  # faw, lane-dense rows
    )

    # VMEM: aux tile + W + mask + (M,M) temporaries are well under the
    # 64 MiB (v7x) / 128 MiB (v5e/v6e) budgets at F=128; re-derive block_b
    # (and set pltpu.CompilerParams(vmem_limit_bytes=...)) if feat_dim grows.
    out_pad, faw_rows = pl.pallas_call(
        weighted_aggregate_kernel,
        out_shape=out_shape,
        grid=(grid_b,),
        in_specs=[
            pl.BlockSpec((block_b, V, F), lambda i: (i, 0, 0)),
            pl.BlockSpec((F, F), lambda i: (0, 0)),
            pl.BlockSpec((m_tile, m_tile), lambda i: (0, 0)),
        ],
        out_specs=(
            pl.BlockSpec((block_b, F), lambda i: (i, 0)),
            pl.BlockSpec((1, 1, m_tile), lambda i: (i, 0, 0)),
        ),
        compiler_params=pltpu.CompilerParams(
            dimension_semantics=("parallel",)),   # v7x: sharded over both TCs
    )(aux_in, attn_w, mask)

    out = out_pad[:B]
    faw = faw_rows.reshape(b_pad, V)[:B]
    return out, faw


if __name__ == "__main__":
    key = jax.random.PRNGKey(0)
    B, V, C, D, H, W = 2, 8, 3, 4, 8, 8
    feat_dim = 128

    k1, k2, k3 = jax.random.split(key, 3)
    mvimages = jax.random.normal(k1, (B, V, C, D, H, W), jnp.float32)

    # TODO(synk): `self.model` is an external, unspecified backbone; stand in
    # with a deterministic linear projection of the flattened clip.
    proj = jax.random.normal(k2, (C * D * H * W, feat_dim), jnp.float32) * 0.02

    # batch_tensor(dim=1, squeeze) -> model -> unbatch_tensor -> identity lifting_net
    feats = mvimages.reshape(B * V, C * D * H * W) @ proj        # (B*V, F)
    aux = feats.reshape(B, V, feat_dim)                          # (B, V, F)

    # attention_weights ~ Uniform(-1, 1):  (r1 - r2) * rand + r2 with r1=-1, r2=1
    attn_w = jax.random.uniform(k3, (feat_dim, feat_dim), jnp.float32,
                                minval=-1.0, maxval=1.0)

    out, faw = weighted_aggregate(aux, attn_w)
    jax.block_until_ready((out, faw))

    # plain-JAX reference for the aggregation math
    aux2_r = jnp.einsum('bvf,fg->bvg', aux, attn_w,
                        precision=jax.lax.Precision.HIGHEST)
    prod_r = jnp.einsum('bvf,buf->bvu', aux2_r, aux2_r,
                        precision=jax.lax.Precision.HIGHEST)
    relu_r = jnp.maximum(prod_r, 0.0)
    tot_r = jnp.sum(relu_r, axis=(1, 2), keepdims=True)
    faw_r = jnp.sum(relu_r / tot_r, axis=1)
    out_r = jnp.sum(aux2_r * faw_r[:, :, None], axis=1)

    assert out.shape == (B, feat_dim) and faw.shape == (B, V)
    assert jnp.allclose(faw, faw_r, rtol=2e-2, atol=2e-3)
    assert jnp.allclose(out, out_r, rtol=2e-2, atol=2e-2)

    print("KERNEL_OK")
</pallas_src>

<mosaic_0001>
module attributes {stable_mosaic.version = 11 : i64} {
  func.func @weighted_aggregate_kernel(%arg0: i32, %arg1: memref<2x8x128xf32, #tpu.memory_space<vmem>>, %arg2: memref<128x128xf32, #tpu.memory_space<vmem>>, %arg3: memref<16x16xf32, #tpu.memory_space<vmem>>, %arg4: memref<2x128xf32, #tpu.memory_space<vmem>>, %arg5: memref<1x1x16xf32, #tpu.memory_space<vmem>>) attributes {dimension_semantics = [#tpu.dimension_semantics<parallel>], iteration_bounds = array<i64: 1>, scalar_prefetch = 0 : i64, scratch_operands = 0 : i64, tpu.core_type = #tpu.core_type<tc>, window_params = [{transform_indices = @transform_0, window_bounds = array<i64: 2, 8, 128>}, {pipeline_mode = #tpu.pipeline_mode<synchronous>, transform_indices = @transform_1, window_bounds = array<i64: 128, 128>}, {pipeline_mode = #tpu.pipeline_mode<synchronous>, transform_indices = @transform_2, window_bounds = array<i64: 16, 16>}, {transform_indices = @transform_3, window_bounds = array<i64: 2, 128>}, {transform_indices = @transform_4, window_bounds = array<i64: 1, 1, 16>}]} {
    %c0 = arith.constant 0 : index
    %c0_0 = arith.constant 0 : index
    %c0_1 = arith.constant 0 : index
    %0 = vector.load %arg1[%c0, %c0_0, %c0_1] : memref<2x8x128xf32, #tpu.memory_space<vmem>>, vector<2x8x128xf32>
    %1 = vector.shape_cast %0 : vector<2x8x128xf32> to vector<16x128xf32>
    %c0_2 = arith.constant 0 : index
    %c0_3 = arith.constant 0 : index
    %2 = vector.load %arg2[%c0_2, %c0_3] : memref<128x128xf32, #tpu.memory_space<vmem>>, vector<128x128xf32>
    %cst = arith.constant dense<0.000000e+00> : vector<16x128xf32>
    %3 = tpu.matmul %1, %2, %cst {dimension_numbers = #tpu.dot_dimension_numbers<[1], [0], [0], [1], [0, 0, 1, 1], [], []>} : vector<16x128xf32>, vector<128x128xf32>, vector<16x128xf32> -> vector<16x128xf32>
    "tpu.trace_start"() <{level = 10 : i32, message = "if,jf->ij"}> : () -> ()
    %cst_4 = arith.constant dense<0.000000e+00> : vector<16x16xf32>
    %4 = tpu.matmul %3, %3, %cst_4 {dimension_numbers = #tpu.dot_dimension_numbers<[1], [1], [0], [0], [0, 0, 1, 0], [], []>} : vector<16x128xf32>, vector<16x128xf32>, vector<16x16xf32> -> vector<16x16xf32>
    "tpu.trace_stop"() : () -> ()
    %c0_5 = arith.constant 0 : index
    %c0_6 = arith.constant 0 : index
    %5 = vector.load %arg3[%c0_5, %c0_6] : memref<16x16xf32, #tpu.memory_space<vmem>>, vector<16x16xf32>
    %cst_7 = arith.constant 0.000000e+00 : f32
    %6 = vector.broadcast %cst_7 : f32 to vector<16x16xf32>
    %7 = arith.maximumf %4, %6 : vector<16x16xf32>
    %8 = arith.mulf %7, %5 : vector<16x16xf32>
    %cst_8 = arith.constant dense<0.000000e+00> : vector<16xf32>
    %9 = vector.multi_reduction <add>, %8, %cst_8 [1] : vector<16x16xf32> to vector<16xf32>
    %10 = vector.shape_cast %9 : vector<16xf32> to vector<16x1xf32>
    %cst_9 = arith.constant dense<0.000000e+00> : vector<16xf32>
    %11 = vector.multi_reduction <add>, %8, %cst_9 [0] : vector<16x16xf32> to vector<16xf32>
    %12 = vector.shape_cast %11 : vector<16xf32> to vector<1x16xf32>
    %13 = vector.broadcast %12 : vector<1x16xf32> to vector<16x16xf32>
    %14 = arith.mulf %5, %13 : vector<16x16xf32>
    %cst_10 = arith.constant dense<0.000000e+00> : vector<16xf32>
    %15 = vector.multi_reduction <add>, %14, %cst_10 [1] : vector<16x16xf32> to vector<16xf32>
    %16 = vector.shape_cast %15 : vector<16xf32> to vector<16x1xf32>
    %17 = vector.broadcast %10 : vector<16x1xf32> to vector<16x16xf32>
    %18 = arith.mulf %5, %17 : vector<16x16xf32>
    %cst_11 = arith.constant dense<0.000000e+00> : vector<16xf32>
    %19 = vector.multi_reduction <add>, %18, %cst_11 [0] : vector<16x16xf32> to vector<16xf32>
    %20 = vector.shape_cast %19 : vector<16xf32> to vector<1x16xf32>
    %21 = tpu.reciprocal %16 {approx = true} : vector<16x1xf32> -> vector<16x1xf32>
    %22 = arith.mulf %10, %21 : vector<16x1xf32>
    %23 = tpu.reciprocal %20 {approx = true} : vector<1x16xf32> -> vector<1x16xf32>
    %24 = arith.mulf %12, %23 : vector<1x16xf32>
    %25 = vector.broadcast %22 : vector<16x1xf32> to vector<16x128xf32>
    %26 = arith.mulf %3, %25 : vector<16x128xf32>
    %27 = vector.shape_cast %26 : vector<16x128xf32> to vector<2x8x128xf32>
    %cst_12 = arith.constant dense<0.000000e+00> : vector<2x128xf32>
    %28 = vector.multi_reduction <add>, %27, %cst_12 [1] : vector<2x8x128xf32> to vector<2x128xf32>
    %c0_13 = arith.constant 0 : index
    %c0_14 = arith.constant 0 : index
    %29 = vector.load %arg4[%c0_13, %c0_14] : memref<2x128xf32, #tpu.memory_space<vmem>>, vector<2x128xf32>
    tpu.vector_store %arg4[%c0_13, %c0_14], %28 {strides = array<i32>} : memref<2x128xf32, #tpu.memory_space<vmem>>, vector<2x128xf32>,
    %30 = vector.shape_cast %24 : vector<1x16xf32> to vector<1x1x16xf32>
    %c0_15 = arith.constant 0 : index
    %c0_16 = arith.constant 0 : index
    %c0_17 = arith.constant 0 : index
    %31 = vector.load %arg5[%c0_15, %c0_16, %c0_17] : memref<1x1x16xf32, #tpu.memory_space<vmem>>, vector<1x1x16xf32>
    tpu.vector_store %arg5[%c0_15, %c0_16, %c0_17], %30 {strides = array<i32>} : memref<1x1x16xf32, #tpu.memory_space<vmem>>, vector<1x1x16xf32>,
    return
  }
  func.func @transform_0(%arg0: i32) -> (i32, i32, i32) {
    %c0_i32 = arith.constant 0 : i32
    %c0_i32_0 = arith.constant 0 : i32
    %c0_i32_1 = arith.constant 0 : i32
    return %arg0, %c0_i32, %c0_i32_0 : i32, i32, i32
  }
  func.func @transform_1(%arg0: i32) -> (i32, i32) {
    %c0_i32 = arith.constant 0 : i32
    %c0_i32_0 = arith.constant 0 : i32
    %c0_i32_1 = arith.constant 0 : i32
    return %c0_i32, %c0_i32_0 : i32, i32
  }
  func.func @transform_2(%arg0: i32) -> (i32, i32) {
    %c0_i32 = arith.constant 0 : i32
    %c0_i32_0 = arith.constant 0 : i32
    %c0_i32_1 = arith.constant 0 : i32
    return %c0_i32, %c0_i32_0 : i32, i32
  }
  func.func @transform_3(%arg0: i32) -> (i32, i32) {
    %c0_i32 = arith.constant 0 : i32
    %c0_i32_0 = arith.constant 0 : i32
    return %arg0, %c0_i32 : i32, i32
  }
  func.func @transform_4(%arg0: i32) -> (i32, i32, i32) {
    %c0_i32 = arith.constant 0 : i32
    %c0_i32_0 = arith.constant 0 : i32
    %c0_i32_1 = arith.constant 0 : i32
    return %arg0, %c0_i32, %c0_i32_0 : i32, i32, i32
  }
}

</mosaic_0001>

<llo_original>
// kernel: tpu_custom_call.1
$region0: #{tpu_custom_call.1}
  #allocation0 [shape = 'u32[]', space=smem, size = 0x4, offset = 0x4, fixed_abs, tag = 'smem constant byte address 0x4 - core index']
  #allocation1 [shape = 'u32[72,128]{1,0:T(1,128)}', space=vmem, size = 0x9000, scoped, tag = 'internal scratch']
  %s0 = inlined_call_operand.hbm [shape: f32[2,8,128], index: 0, kind: input, shape index: {}]
  %s1 = inlined_call_operand.hbm [shape: f32[128,128], index: 1, kind: input, shape index: {}]
  %s2 = inlined_call_operand.hbm [shape: f32[16,16], index: 2, kind: input, shape index: {}]
  %s3 = inlined_call_operand.hbm [shape: f32[2,128], index: 3, kind: output, shape index: {0}]
  %s4 = inlined_call_operand.hbm [shape: f32[1,1,16], index: 4, kind: output, shape index: {1}]
  %5 = xla_tuple %s3, %s4
  %s6 = sld [smem:[#allocation0]]
  $region42: #{tpu_custom_call.1} parent=0
    _
  %s8 = ssub.s32 1, %s6
  %s9 = scalar_select 0, %s8, %s6
  $region1: #{tpu_custom_call.1} parent=0
    #allocation2 [shape = 'u8[8192]{0}', space=vmem, size = 0x2000, scoped, tag = 'input window, operand 0, single buffered']
    #allocation3 [shape = 's32[1]{0}', space=sflag, size = 0x4, scoped, tag = 'scoped memory for tpu_custom_call.1']
    #allocation4 [shape = 's32[1]{0}', space=sflag, size = 0x4, scoped, tag = 'scoped memory for tpu_custom_call.1']
    #allocation5 [shape = 'u8[65536]{0}', space=vmem, size = 0x10000, scoped, tag = 'input window, operand 1, single buffered']
    #allocation6 [shape = 's32[1]{0}', space=sflag, size = 0x4, scoped, tag = 'scoped memory for tpu_custom_call.1']
    #allocation7 [shape = 'u8[8192]{0}', space=vmem, size = 0x2000, scoped, tag = 'input window, operand 2, single buffered']
    #allocation8 [shape = 'u8[1024]{0}', space=vmem, size = 0x400, scoped, tag = 'output window, operand 0, single buffered']
    #allocation9 [shape = 'u8[512]{0}', space=vmem, size = 0x400, scoped, tag = 'output window, operand 1, single buffered']
    #allocation10 [shape = 's32[1]{0}', space=sflag, size = 0x4, scoped, tag = 'scoped memory for tpu_custom_call.1']
    %10 = vsyncpa [#allocation3], 0
    %11 = vsyncpa [#allocation6], 0
    %12 = vsyncpa [#allocation4], 0
    %13 = vsyncpa [#allocation10], 0
    // Predicated region
    $region2: #{tpu_custom_call.1} parent=1 // pred_check
      _
    $region3: #{tpu_custom_call.1} parent=1 // pred_check_branch
      %15 = sbr.rel (0) target = $region5
    $region4: #{tpu_custom_call.1} parent=1 // pred_region
      %17 = vsyncadd [#allocation3], 0
      %s18 = sshll.u32 %s0, 4
      %s19 = int_to_ptr.hbm [resolvable:$true] %s18
      %s20 = sshll.u32 [#allocation2], 4
      %s21 = int_to_ptr.vmem [resolvable:$true] %s20
      %26 = dma.hbm_to_vmem [thread:$0]  %s19, 256, %s21, [#allocation3], 128, 128, 8
    $region5: #{tpu_custom_call.1} parent=1 // pred_fallthru
      _
    // Predicated region
    $region6: #{tpu_custom_call.1} parent=1 // pred_check
      _
    $region7: #{tpu_custom_call.1} parent=1 // pred_check_branch
      %28 = sbr.rel (0) target = $region9
    $region8: #{tpu_custom_call.1} parent=1 // pred_region
      %30 = vsyncadd [#allocation6], 0
      %s31 = sshll.u32 %s1, 4
      %s32 = int_to_ptr.hbm [resolvable:$true] %s31
      %s33 = sshll.u32 [#allocation5], 4
      %s34 = int_to_ptr.vmem [resolvable:$true] %s33
      %39 = dma.hbm_to_vmem [thread:$0]  %s32, 2048, %s34, [#allocation6], 128, 128, 8
    $region9: #{tpu_custom_call.1} parent=1 // pred_fallthru
      _
    // Predicated region
    $region10: #{tpu_custom_call.1} parent=1 // pred_check
      _
    $region11: #{tpu_custom_call.1} parent=1 // pred_check_branch
      %41 = sbr.rel (0) target = $region13
    $region12: #{tpu_custom_call.1} parent=1 // pred_region
      %43 = vsyncadd [#allocation6], 0
      %s44 = sshll.u32 %s2, 4
      %s45 = int_to_ptr.hbm [resolvable:$true] %s44
      %s46 = sshll.u32 [#allocation7], 4
      %s47 = int_to_ptr.vmem [resolvable:$true] %s46
      %52 = dma.hbm_to_vmem [thread:$0]  %s45, 256, %s47, [#allocation6], 128, 128, 8
    $region13: #{tpu_custom_call.1} parent=1 // pred_fallthru
      _
    // Predicated region
    $region14: #{tpu_custom_call.1} parent=1 // pred_check
      _
    $region15: #{tpu_custom_call.1} parent=1 // pred_check_branch
      %54 = sbr.rel (0) target = $region17
    $region16: #{tpu_custom_call.1} parent=1 // pred_region
      %56 = dma.done [#allocation3], 256
    $region17: #{tpu_custom_call.1} parent=1 // pred_fallthru
      _
    // Predicated region
    $region18: #{tpu_custom_call.1} parent=1 // pred_check
      _
    $region19: #{tpu_custom_call.1} parent=1 // pred_check_branch
      %58 = sbr.rel (0) target = $region21
    $region20: #{tpu_custom_call.1} parent=1 // pred_region
      %60 = dma.done [#allocation6], 2048
    $region21: #{tpu_custom_call.1} parent=1 // pred_fallthru
      _
    // Predicated region
    $region22: #{tpu_custom_call.1} parent=1 // pred_check
      _
    $region23: #{tpu_custom_call.1} parent=1 // pred_check_branch
      %62 = sbr.rel (0) target = $region25
    $region24: #{tpu_custom_call.1} parent=1 // pred_region
      %64 = dma.done [#allocation6], 256
    $region25: #{tpu_custom_call.1} parent=1 // pred_fallthru
      _
    %v65 = vld [vmem:[#allocation2] sm:$0xff]
    %v66 = vld [vmem:[#allocation2 + $0x8] sm:$0xff]
    %v67 = vld [vmem:[#allocation5] sm:$0xff]
    %v68 = vld [vmem:[#allocation5 + $0x8] sm:$0xff]
    %v69 = vld [vmem:[#allocation5 + $0x10] sm:$0xff]
    %v70 = vld [vmem:[#allocation5 + $0x18] sm:$0xff]
    %v71 = vld [vmem:[#allocation5 + $0x20] sm:$0xff]
    %v72 = vld [vmem:[#allocation5 + $0x28] sm:$0xff]
    %v73 = vld [vmem:[#allocation5 + $0x30] sm:$0xff]
    %v74 = vld [vmem:[#allocation5 + $0x38] sm:$0xff]
    %v75 = vld [vmem:[#allocation5 + $0x40] sm:$0xff]
    %v76 = vld [vmem:[#allocation5 + $0x48] sm:$0xff]
    %v77 = vld [vmem:[#allocation5 + $0x50] sm:$0xff]
    %v78 = vld [vmem:[#allocation5 + $0x58] sm:$0xff]
    %v79 = vld [vmem:[#allocation5 + $0x60] sm:$0xff]
    %v80 = vld [vmem:[#allocation5 + $0x68] sm:$0xff]
    %v81 = vld [vmem:[#allocation5 + $0x70] sm:$0xff]
    %v82 = vld [vmem:[#allocation5 + $0x78] sm:$0xff]
    %83 = vmatpush.msra.mxu0 %v82
    %84 = vmatpush.msra.mxu0 %v81
    %85 = vmatpush.msra.mxu0 %v80
    %86 = vmatpush.msra.mxu0 %v79
    %87 = vmatpush.msra.mxu0 %v78
    %88 = vmatpush.msra.mxu0 %v77
    %89 = vmatpush.msra.mxu0 %v76
    %90 = vmatpush.msra.mxu0 %v75
    %91 = vmatpush.msra.mxu0 %v74
    %92 = vmatpush.msra.mxu0 %v73
    %93 = vmatpush.msra.mxu0 %v72
    %94 = vmatpush.msra.mxu0 %v71
    %95 = vmatpush.msra.mxu0 %v70
    %96 = vmatpush.msra.mxu0 %v69
    %97 = vmatpush.msra.mxu0 %v68
    %98 = vmatpush.msra.mxu0 %v67
    %99 = vmatmul.f32.gmra.mxu0 %v65
    %v100 = vpop.f32.mrf.mxu0
    %v101 = vadd.f32 0.0, %v100
    %102 = vmatmul.f32.gmra.mxu0 %v66
    %v103 = vpop.f32.mrf.mxu0
    %v104 = vadd.f32 0.0, %v103
    %105 = vdwg.mxu0
    %106 = vmatpush.xpose.msra.mxu0 0.0
    %107 = vmatpush.xpose.msra.mxu0 0.0
    %108 = vmatpush.xpose.msra.mxu0 0.0
    %109 = vmatpush.xpose.msra.mxu0 0.0
    %110 = vmatpush.xpose.msra.mxu0 0.0
    %111 = vmatpush.xpose.msra.mxu0 0.0
    %112 = vmatpush.xpose.msra.mxu0 0.0
    %113 = vmatpush.xpose.msra.mxu0 0.0
    %114 = vmatpush.xpose.msra.mxu0 0.0
    %115 = vmatpush.xpose.msra.mxu0 0.0
    %116 = vmatpush.xpose.msra.mxu0 0.0
    %117 = vmatpush.xpose.msra.mxu0 0.0
    %118 = vmatpush.xpose.msra.mxu0 0.0
    %119 = vmatpush.xpose.msra.mxu0 0.0
    %120 = vmatpush.xpose.msra.mxu0 %v104
    %121 = vmatpush.xpose.msra.mxu0 %v101
    %122 = vmatmul.f32.gmra.mxu0 %v101
    %v123 = vpop.f32.mrf.mxu0
    %v124 = vadd.f32 0.0, %v123
    %125 = vmatmul.f32.gmra.mxu0 %v104
    %v126 = vpop.f32.mrf.mxu0
    %v127 = vadd.f32 0.0, %v126
    %128 = vdwg.mxu0
    %v129 = vld [vmem:[#allocation7] sm:$0xff]
    %v130 = vld [vmem:[#allocation7 + $0x8] sm:$0xff]
    %v131 = vmax.f32 %v124, 0.0
    %v132 = vmax.f32 %v127, 0.0
    %v133 = vmul.f32 %v131, %v129
    %v134 = vmul.f32 %v132, %v130
    %vm135 = vcmask 130048
    %v136 = vsel %vm135, %v133, 0.0
    %137 = vadd.xlane.f32.xlu0 %v136
    %v138 = vpop.xlane.xlu0 %137
    %v139 = vsel %vm135, %v134, 0.0
    %140 = vadd.xlane.f32.xlu0 %v139
    %v141 = vpop.xlane.xlu0 %140
    %v142 = vadd.f32 %v136, %v139
    %v143 = vrot.slane %v142, 4
    %v144 = vadd.f32 %v142, %v143
    %v145 = vrot.slane %v144, 2
    %v146 = vadd.f32 %v144, %v145
    %v147 = vrot.slane %v146, 1
    %v148 = vadd.f32 %v146, %v147
    %v149 = vmul.f32 %v129, %v148
    %v150 = vmul.f32 %v130, %v148
    %v151 = vsel %vm135, %v149, 0.0
    %152 = vadd.xlane.f32.xlu0 %v151
    %v153 = vpop.xlane.xlu0 %152
    %v154 = vsel %vm135, %v150, 0.0
    %155 = vadd.xlane.f32.xlu0 %v154
    %v156 = vpop.xlane.xlu0 %155
    %v157 = vmul.f32 %v129, %v138
    %v158 = vmul.f32 %v130, %v141
    %v159 = vsel %vm135, %v157, 0.0
    %v160 = vsel %vm135, %v158, 0.0
    %v161 = vadd.f32 %v159, %v160
    %v162 = vrot.slane %v161, 4
    %v163 = vadd.f32 %v161, %v162
    %v164 = vrot.slane %v163, 2
    %v165 = vadd.f32 %v163, %v164
    %v166 = vrot.slane %v165, 1
    %v167 = vadd.f32 %v165, %v166
    %v168 = vrcp.pop %v153
    %v169 = vrcp.pop %v156
    %v170 = vmul.f32 %v138, %v168
    %v171 = vmul.f32 %v141, %v169
    %v172 = vrcp.pop %v167
    %v173 = vmul.f32 %v148, %v172
    %v174 = vmul.f32 %v101, %v170
    %v175 = vmul.f32 %v104, %v171
    %v176 = vrot.slane %v174, 4
    %v177 = vadd.f32 %v174, %v176
    %v178 = vrot.slane %v177, 2
    %v179 = vadd.f32 %v177, %v178
    %v180 = vrot.slane %v179, 1
    %v181 = vadd.f32 %v179, %v180
    %v182 = vrot.slane %v175, 4
    %v183 = vadd.f32 %v175, %v182
    %v184 = vrot.slane %v183, 2
    %v185 = vadd.f32 %v183, %v184
    %v186 = vrot.slane %v185, 1
    %v187 = vadd.f32 %v185, %v186
    %vm190 = vcmask 1041409
    %v191 = vsel %vm190, %v187, %v181
    %193 = vst [vmem:[#allocation8] sm:$0x3] %v191
    %vm194 = vcmask 122880
    %195 = vst.msk [vmem:[#allocation9] sm:$0x1] %vm194, %v173
    // Predicated region
    $region26: #{tpu_custom_call.1} parent=1 // pred_check
      _
    $region27: #{tpu_custom_call.1} parent=1 // pred_check_branch
      %197 = sbr.rel (0) target = $region29
    $region28: #{tpu_custom_call.1} parent=1 // pred_region
      %199 = vsyncadd [#allocation4], 0
      %s201 = sshll.u32 [#allocation8], 4
      %s202 = int_to_ptr.vmem [resolvable:$true] %s201
      %s203 = sshll.u32 %s3, 4
      %s204 = int_to_ptr.hbm [resolvable:$true] %s203
      %206 = dma.vmem_to_hbm [thread:$0]  %s202, 32, %s204, [#allocation4]
    $region29: #{tpu_custom_call.1} parent=1 // pred_fallthru
      _
    // Predicated region
    $region30: #{tpu_custom_call.1} parent=1 // pred_check
      _
    $region31: #{tpu_custom_call.1} parent=1 // pred_check_branch
      %208 = sbr.rel (0) target = $region33
    $region32: #{tpu_custom_call.1} parent=1 // pred_region
      %210 = vsyncadd [#allocation10], 0
      %s212 = sshll.u32 [#allocation9], 4
      %s213 = int_to_ptr.vmem [resolvable:$true] %s212
      %s214 = sshll.u32 %s4, 4
      %s215 = int_to_ptr.hbm [resolvable:$true] %s214
      %217 = dma.vmem_to_hbm [thread:$0]  %s213, 16, %s215, [#allocation10]
    $region33: #{tpu_custom_call.1} parent=1 // pred_fallthru
      _
    // Predicated region
    $region34: #{tpu_custom_call.1} parent=1 // pred_check
      _
    $region35: #{tpu_custom_call.1} parent=1 // pred_check_branch
      %219 = sbr.rel (0) target = $region37
    $region36: #{tpu_custom_call.1} parent=1 // pred_region
      %221 = dma.done [#allocation4], 32
    $region37: #{tpu_custom_call.1} parent=1 // pred_fallthru
      _
    // Predicated region
    $region38: #{tpu_custom_call.1} parent=1 // pred_check
      _
    $region39: #{tpu_custom_call.1} parent=1 // pred_check_branch
      %223 = sbr.rel (0) target = $region41
    $region40: #{tpu_custom_call.1} parent=1 // pred_region
      %225 = dma.done [#allocation10], 16
    $region41: #{tpu_custom_call.1} parent=1 // pred_fallthru
      _
    %226 = vsyncpa [#allocation3], 1
    %227 = vsyncpa [#allocation6], 1
    %228 = vsyncpa [#allocation4], 1
    %229 = vsyncpa [#allocation10], 1

</llo_original>
